<compile_context>
chip_gen: v7x
topology: tpu7x:2x2x1
jax: 0.10.0
libtpu: 0.0.40
codegen_flags: <defaults>
</compile_context>

<pallas_src>
from functools import partial

import numpy as np
import jax
import jax.numpy as jnp
from jax.experimental import pallas as pl
from jax.experimental.pallas import tpu as pltpu


_LANES = 128              # vreg lane width (fast axis)
_TILE_BYTES = 4 << 20     # ~4 MiB per tile, dtype-independent


def _copy_kernel(x_ref, o_ref):
    # Identity copy of one sublane/lane-dense (tm, 128) tile through VMEM.
    o_ref[...] = x_ref[...]


def _round_up(x, m):
    return ((x + m - 1) // m) * m


def _choose_tile_rows(rows, sublane, itemsize):
    """Pick a tile height: ~4 MiB, multiple of the dtype's sublane packing."""
    target = _TILE_BYTES // (_LANES * itemsize)          # 8192 f32 / 16384 bf16 / 32768 i8
    tm = min(target, _round_up(rows, sublane))
    # Prefer an even number of grid steps so v7x's 2 TensorCores stay balanced
    # under the "parallel" grid axis (no-op on single-TC v5e/v6e).
    steps = pl.cdiv(rows, tm)
    if steps > 1 and steps % 2 == 1:
        tm_even = _round_up(pl.cdiv(rows, steps + 1), sublane)
        if pl.cdiv(rows, tm_even) % 2 == 0:
            tm = tm_even
    return tm


@partial(jax.jit, static_argnames=("tm",), donate_argnums=(0,))
def _identity_copy(slab, *, tm):
    rows, lanes = slab.shape
    return pl.pallas_call(
        _copy_kernel,
        out_shape=jax.ShapeDtypeStruct((rows, lanes), slab.dtype),
        grid=(pl.cdiv(rows, tm),),
        in_specs=[pl.BlockSpec((tm, lanes), lambda i: (i, 0))],
        out_specs=pl.BlockSpec((tm, lanes), lambda i: (i, 0)),
        input_output_aliases={0: 0},      # in-place: output reuses input HBM buffer
        compiler_params=pltpu.CompilerParams(
            dimension_semantics=("parallel",),   # shards rows across 2 TCs on v7x
            vmem_limit_bytes=32 << 20,           # lifts v5e's 16 MiB scoped default
        ),
    )(slab)


def flatten_layer(x):
    """Pallas equivalent of FlattenLayer.forward: (B, ...) -> (B, prod(...))."""
    B = x.shape[0]
    F = int(np.prod(x.shape[1:])) if x.ndim > 1 else 1
    out_shape = (B, F)
    N = B * F

    if N == 0:
        return x.reshape(out_shape)

    # The flatten itself is metadata-only, row-major reshape (== torch .view).
    flat = x.reshape(N)

    itemsize = jnp.dtype(x.dtype).itemsize
    sublane = max(8, 32 // itemsize)          # 8 f32, 16 bf16, 32 int8/fp8

    if N % _LANES == 0:
        # Fast path: no pad, no trailing slice — exactly 2N bytes of HBM traffic.
        rows = N // _LANES
        slab = flat.reshape(rows, _LANES)
        tm = _choose_tile_rows(rows, sublane, itemsize)
        out = _identity_copy(slab, tm=tm)
        return out.reshape(out_shape)

    # Ragged tail: pad only up to the next 128-lane boundary (< 128 elements),
    # never up to a multiple of the tile; partial last block is masked by Pallas.
    # TODO(synk): the pad/slice copies could be avoided entirely by dropping the
    # kernel (flatten is pure reshape glue), kept only because a pallas_call is required.
    n_pad = _round_up(N, _LANES)
    rows = n_pad // _LANES
    slab = jnp.pad(flat, (0, n_pad - N)).reshape(rows, _LANES)
    tm = _choose_tile_rows(rows, sublane, itemsize)
    out = _identity_copy(slab, tm=tm)
    return out.reshape(n_pad)[:N].reshape(out_shape)


if __name__ == "__main__":
    key = jax.random.PRNGKey(0)
    # Small NCHW input consistent with a conv-style feature map.
    x = jax.random.normal(key, (2, 4, 16, 16), dtype=jnp.float32)

    y = flatten_layer(x)
    y = jax.block_until_ready(y)

    # Reference: plain row-major flatten (what torch .view produces).
    ref = np.asarray(x).reshape(x.shape[0], -1)
    assert y.shape == (2, 4 * 16 * 16), y.shape
    assert y.dtype == x.dtype
    np.testing.assert_array_equal(np.asarray(y), ref)

    print("KERNEL_OK")
</pallas_src>

<mosaic_0001>
module attributes {stable_mosaic.version = 11 : i64} {
  func.func @_copy_kernel(%arg0: i32, %arg1: memref<16x128xf32, #tpu.memory_space<vmem>>, %arg2: memref<16x128xf32, #tpu.memory_space<vmem>>) attributes {dimension_semantics = [#tpu.dimension_semantics<parallel>], iteration_bounds = array<i64: 1>, scalar_prefetch = 0 : i64, scratch_operands = 0 : i64, tpu.core_type = #tpu.core_type<tc>, window_params = [{transform_indices = @transform_0, window_bounds = array<i64: 16, 128>}, {transform_indices = @transform_1, window_bounds = array<i64: 16, 128>}]} {
    %c0 = arith.constant 0 : index
    %c0_0 = arith.constant 0 : index
    %0 = vector.load %arg1[%c0, %c0_0] : memref<16x128xf32, #tpu.memory_space<vmem>>, vector<16x128xf32>
    %c0_1 = arith.constant 0 : index
    %c0_2 = arith.constant 0 : index
    %1 = vector.load %arg2[%c0_1, %c0_2] : memref<16x128xf32, #tpu.memory_space<vmem>>, vector<16x128xf32>
    tpu.vector_store %arg2[%c0_1, %c0_2], %0 {strides = array<i32>} : memref<16x128xf32, #tpu.memory_space<vmem>>, vector<16x128xf32>,
    return
  }
  func.func @transform_0(%arg0: i32) -> (i32, i32) {
    %c0_i32 = arith.constant 0 : i32
    %c0_i32_0 = arith.constant 0 : i32
    return %arg0, %c0_i32 : i32, i32
  }
  func.func @transform_1(%arg0: i32) -> (i32, i32) {
    %c0_i32 = arith.constant 0 : i32
    %c0_i32_0 = arith.constant 0 : i32
    return %arg0, %c0_i32 : i32, i32
  }
}

</mosaic_0001>

<llo_original>
// kernel: _identity_copy.1
$region0: #{_identity_copy.1}
  #allocation0 [shape = 'u32[]', space=smem, size = 0x4, offset = 0x4, fixed_abs, tag = 'smem constant byte address 0x4 - core index']
  #allocation1 [shape = 'u32[144,128]{1,0:T(1,128)}', space=vmem, size = 0x12000, scoped, tag = 'internal scratch']
  %s0 = inlined_call_operand.hbm [shape: f32[16,128], index: 0, kind: input, shape index: {}, may-alias: {0,1}]
  %s1 = inlined_call_operand.hbm [shape: f32[16,128], index: 1, kind: output, shape index: {}, may-alias: {0,1}]
  %s2 = sld [smem:[#allocation0]]
  $region18: #{_identity_copy.1} parent=0
    _
  %s4 = ssub.s32 1, %s2
  %s5 = scalar_select 0, %s4, %s2
  $region1: #{_identity_copy.1} parent=0
    #allocation2 [shape = 'u8[8192]{0}', space=vmem, size = 0x2000, scoped, tag = 'input window, operand 0, single buffered']
    #allocation3 [shape = 's32[1]{0}', space=sflag, size = 0x4, scoped, tag = 'scoped memory for _identity_copy.1']
    #allocation4 [shape = 's32[1]{0}', space=sflag, size = 0x4, scoped, tag = 'scoped memory for _identity_copy.1']
    #allocation5 [shape = 'u8[8192]{0}', space=vmem, size = 0x2000, scoped, tag = 'output window, operand 0, single buffered']
    %6 = vsyncpa [#allocation3], 0
    %7 = vsyncpa [#allocation4], 0
    // Predicated region
    $region2: #{_identity_copy.1} parent=1 // pred_check
      _
    $region3: #{_identity_copy.1} parent=1 // pred_check_branch
      %9 = sbr.rel (0) target = $region5
    $region4: #{_identity_copy.1} parent=1 // pred_region
      %s11 = ssub.s32 256, 256
      %12 = vsyncadd [#allocation3], %s11
      %s13 = sshll.u32 [#allocation2], 4
      %s14 = int_to_ptr.vmem [resolvable:$true] %s13
      %19 = dma.hbm_to_vmem [thread:$0]  %s0, 256, %s14, [#allocation3], 128, 128, 8
    $region5: #{_identity_copy.1} parent=1 // pred_fallthru
      _
    // Predicated region
    $region6: #{_identity_copy.1} parent=1 // pred_check
      _
    $region7: #{_identity_copy.1} parent=1 // pred_check_branch
      %21 = sbr.rel (0) target = $region9
    $region8: #{_identity_copy.1} parent=1 // pred_region
      %22 = dma.done [#allocation3], 256
    $region9: #{_identity_copy.1} parent=1 // pred_fallthru
      _
    %v23 = vld [vmem:[#allocation2] sm:$0xff]
    %v24 = vld [vmem:[#allocation2 + $0x8] sm:$0xff]
    %25 = vst [vmem:[#allocation5] sm:$0xff] %v23
    %26 = vst [vmem:[#allocation5 + $0x8] sm:$0xff] %v24
    // Predicated region
    $region10: #{_identity_copy.1} parent=1 // pred_check
      _
    $region11: #{_identity_copy.1} parent=1 // pred_check_branch
      %28 = sbr.rel (0) target = $region13
    $region12: #{_identity_copy.1} parent=1 // pred_region
      %s30 = ssub.s32 256, 256
      %31 = vsyncadd [#allocation4], %s30
      %s32 = sshll.u32 [#allocation5], 4
      %s33 = int_to_ptr.vmem [resolvable:$true] %s32
      %38 = dma.vmem_to_hbm [thread:$0]  %s33, 256, %s1, [#allocation4], 128, 128, 8
    $region13: #{_identity_copy.1} parent=1 // pred_fallthru
      _
    // Predicated region
    $region14: #{_identity_copy.1} parent=1 // pred_check
      _
    $region15: #{_identity_copy.1} parent=1 // pred_check_branch
      %40 = sbr.rel (0) target = $region17
    $region16: #{_identity_copy.1} parent=1 // pred_region
      %41 = dma.done [#allocation4], 256
    $region17: #{_identity_copy.1} parent=1 // pred_fallthru
      _
    %42 = vsyncpa [#allocation3], 1
    %43 = vsyncpa [#allocation4], 1

</llo_original>
